<compile_context>
chip_gen: v7x
topology: tpu7x:2x2x1
jax: 0.10.0
libtpu: 0.0.40
codegen_flags: <defaults>
</compile_context>

<pallas_src>
import jax
import jax.numpy as jnp
from jax.experimental import pallas as pl
from jax.experimental.pallas import tpu as pltpu

SELU_ALPHA = 1.6732632423543772
SELU_SCALE = 1.0507009873554805

_ONEHOT_BUDGET_BYTES = 4 << 20   # per-grid-step (V, tm) one-hot footprint cap
_TABLE_BUDGET_BYTES = 4 << 20    # VMEM-resident tab1^T (D, V) cap


def _round_up(n, m):
    return ((n + m - 1) // m) * m


def _selu(x):
    return SELU_SCALE * jnp.where(x > 0, x, SELU_ALPHA * jnp.expm1(x))


def _mlp_tail(h1T, w2_ref, b2_ref, w3_ref, b3_ref):
    """Token-on-lanes MLP tail.  h1T: (D, TM).  Returns (1, TM) float32.

    h2^T = W2_pt @ h1^T + b2_col (W2_pt is the PyTorch (out, in) weight),
    then tanh, then the D->1 projection as a lane-dense sublane reduction
    (avoids a width-1 MXU matmul and masked partial stores).
    """
    mm_dtype = w2_ref.dtype
    h2 = jnp.dot(w2_ref[...], h1T.astype(mm_dtype),
                 preferred_element_type=jnp.float32) + b2_ref[...]
    h2 = jnp.tanh(h2)
    # Dropout(0.1) is identity in eval mode.
    # TODO(synk): training-mode dropout (pltpu.prng_seed / prng_random_bits mask).
    return jnp.sum(h2 * w3_ref[...], axis=0, keepdims=True) + b3_ref[...]


def spelling_fused_kernel(ids_ref, tab1T_ref, w2_ref, b2_ref, w3_ref, b3_ref,
                          o_ref):
    """Small-vocab path: in-kernel gather of the folded SELU(emb@W1+b1) table
    (one-hot matmul vs. the VMEM-resident (D, V) table) + MLP tail."""
    V = tab1T_ref.shape[1]
    TM = ids_ref.shape[1]
    ids = ids_ref[...]                                              # (1, TM) i32
    one_hot = (jax.lax.broadcasted_iota(jnp.int32, (V, TM), 0) == ids)
    one_hot = one_hot.astype(tab1T_ref.dtype)                       # (V, TM)
    h1T = jnp.dot(tab1T_ref[...], one_hot,
                  preferred_element_type=jnp.float32)               # (D, TM) f32
    o_ref[...] = _mlp_tail(h1T, w2_ref, b2_ref, w3_ref, b3_ref).astype(o_ref.dtype)


def spelling_tail_kernel(h1_ref, w2_ref, b2_ref, w3_ref, b3_ref, o_ref):
    """Large-vocab path: tab1 rows gathered in XLA, streamed token-major
    (tm, D) and transposed in-kernel (XLU) to the token-on-lanes layout."""
    # TODO(synk): move the gather fully in-kernel (scalar-prefetched ids + DMA)
    # to drop the (N, D) HBM round trip of the gathered activations.
    h1T = h1_ref[...].T                                             # (D, TM)
    o_ref[...] = _mlp_tail(h1T, w2_ref, b2_ref, w3_ref, b3_ref).astype(o_ref.dtype)


def spelling_model_forward(vocab_ids, params, *, tile_tokens=2048,
                           matmul_dtype=jnp.float32, fuse_gather=None,
                           fold="h1"):
    """vocab_ids: (B, S) int32.  Returns (B, S, 1) float32.

    fold="h1"   : precompute tab1 = SELU(emb @ W1.T + b1) (frozen) and run the
                  Linear2 + Tanh + Linear3 tail in the Pallas kernel (default).
    fold="full" : eval-mode output is a pure function of the token id, so
                  compute the whole (V,) output table once with the same
                  Pallas kernel and gather it (cache it across calls in
                  production inference).
    """
    emb_table = params["embeddings"]          # (V, D) frozen
    w1, b1 = params["w1"], params["b1"]       # (D, D) in->out, (D,)
    w2, b2 = params["w2"], params["b2"]       # (D, D) in->out, (D,)
    w3, b3 = params["w3"], params["b3"]       # (D, 1), (1,)

    B, S = vocab_ids.shape
    V, D = emb_table.shape
    N = B * S

    if fold == "full":
        out_table = spelling_model_forward(
            jnp.arange(V, dtype=jnp.int32).reshape(1, V), params,
            tile_tokens=tile_tokens, matmul_dtype=matmul_dtype,
            fuse_gather=fuse_gather, fold="h1").reshape(V)
        return jnp.take(out_table, vocab_ids.reshape(-1)).reshape(B, S, 1)
    assert fold == "h1", fold

    # Frozen fold: +b1 / SELU are elementwise, so they commute with the
    # one-hot row selection -> precomputing them over the vocab is exact.
    tab1 = _selu(emb_table.astype(jnp.float32) @ w1 + b1)            # (V, D) f32

    # Token tile on the lane axis: multiple of 128, <= tile_tokens, capped so
    # that large inputs still give >= ~4 grid steps (pipelining / v7x 2 TCs).
    tm = _round_up(min(tile_tokens, max(128, pl.cdiv(N, 4))), 128)

    if fuse_gather is None or fuse_gather:
        # Fuse the gather only if (a) the transposed table stays VMEM-resident
        # and (b) the per-step one-hot (V, tm) fits a small budget (tm shrinks
        # with V; below tm=128 we fall back to the XLA gather path).
        table_ok = V * D * jnp.dtype(matmul_dtype).itemsize <= _TABLE_BUDGET_BYTES
        tm_cap = (_ONEHOT_BUDGET_BYTES // (4 * V)) // 128 * 128
        can_fuse = table_ok and tm_cap >= 128
        if fuse_gather is None:
            fuse_gather = can_fuse
        elif fuse_gather and not can_fuse:
            raise ValueError("fuse_gather=True: vocab too large for the "
                             "VMEM-resident fused gather; use fuse_gather=False")
        if fuse_gather:
            tm = min(tm, tm_cap)

    Np = _round_up(N, tm)
    grid = (Np // tm,)

    # Transposed parameter layout: h^T = W_pt @ x^T + b_col, W_pt = (out, in).
    w2k = w2.T.astype(matmul_dtype)
    b2c = b2.reshape(D, 1).astype(jnp.float32)
    w3c = w3.reshape(D, 1).astype(jnp.float32)
    b3s = b3.reshape(1, 1).astype(jnp.float32)

    weight_specs = [
        pl.BlockSpec((D, D), lambda i: (0, 0)),    # w2 (out, in)
        pl.BlockSpec((D, 1), lambda i: (0, 0)),    # b2 column
        pl.BlockSpec((D, 1), lambda i: (0, 0)),    # w3 column
        pl.BlockSpec((1, 1), lambda i: (0, 0)),    # b3 scalar
    ]
    out_spec = pl.BlockSpec((1, tm), lambda i: (0, i))   # lane-dense output
    compiler_params = pltpu.CompilerParams(
        dimension_semantics=("parallel",),
        vmem_limit_bytes=32 * 1024 * 1024)

    ids = vocab_ids.reshape(-1).astype(jnp.int32)
    ids = jnp.pad(ids, (0, Np - N))                      # pad with id 0 (discarded)

    if fuse_gather:
        tab1T = tab1.T.astype(matmul_dtype)              # (D, V), VMEM-resident
        out = pl.pallas_call(
            spelling_fused_kernel,
            out_shape=jax.ShapeDtypeStruct((1, Np), jnp.float32),
            grid_spec=pltpu.PrefetchScalarGridSpec(
                num_scalar_prefetch=0,
                grid=grid,
                in_specs=[pl.BlockSpec((1, tm), lambda i: (0, i)),  # ids tile
                          pl.BlockSpec((D, V), lambda i: (0, 0))]   # tab1^T
                         + weight_specs,
                out_specs=out_spec),
            compiler_params=compiler_params,
        )(ids.reshape(1, Np), tab1T, w2k, b2c, w3c, b3s)
    else:
        # Large-vocab path: gather the padded ids in XLA (writes the padded
        # token-major slab directly -> no extra transpose/pad HBM passes) and
        # stream (tm, D) tiles; the transpose to token-on-lanes is in-kernel.
        h1 = jnp.take(tab1.astype(matmul_dtype), ids, axis=0)       # (Np, D)
        out = pl.pallas_call(
            spelling_tail_kernel,
            out_shape=jax.ShapeDtypeStruct((1, Np), jnp.float32),
            grid_spec=pltpu.PrefetchScalarGridSpec(
                num_scalar_prefetch=0,
                grid=grid,
                in_specs=[pl.BlockSpec((tm, D), lambda i: (i, 0))]  # h1 tile
                         + weight_specs,
                out_specs=out_spec),
            compiler_params=compiler_params,
        )(h1, w2k, b2c, w3c, b3s)

    return out[0, :N].reshape(B, S, 1)


def init_params(key, vocab_size, n_dims):
    """Deterministic synthetic parameters matching the module's shapes.

    Weights are stored (in, out) so the reference computes x @ W + b; the
    wrapper transposes to PyTorch's (out, in) for the token-on-lanes kernel.
    """
    ks = jax.random.split(key, 7)
    scale = 1.0 / jnp.sqrt(n_dims)
    return {
        "embeddings": jax.random.normal(ks[0], (vocab_size, n_dims), jnp.float32) * 0.02,
        "w1": jax.random.uniform(ks[1], (n_dims, n_dims), jnp.float32, -scale, scale),
        "b1": jax.random.uniform(ks[2], (n_dims,), jnp.float32, -scale, scale),
        "w2": jax.random.uniform(ks[3], (n_dims, n_dims), jnp.float32, -scale, scale),
        "b2": jax.random.uniform(ks[4], (n_dims,), jnp.float32, -scale, scale),
        "w3": jax.random.uniform(ks[5], (n_dims, 1), jnp.float32, -scale, scale),
        "b3": jax.random.uniform(ks[6], (1,), jnp.float32, -scale, scale),
    }


def reference_forward(vocab_ids, params):
    """Pure-JAX reference of the same forward for sanity checking."""
    x = jnp.take(params["embeddings"], vocab_ids, axis=0)
    h1 = _selu(x @ params["w1"] + params["b1"])
    h2 = jnp.tanh(h1 @ params["w2"] + params["b2"])
    return h2 @ params["w3"] + params["b3"]


if __name__ == "__main__":
    key = jax.random.PRNGKey(0)
    k_param, k_ids = jax.random.split(key)

    VOCAB = 64     # small synthetic vocab
    D = 32         # n_dims (hidden size of frozen embeddings)
    B, S = 2, 8    # batch, sequence of vocab ids

    params = init_params(k_param, VOCAB, D)
    vocab_ids = jax.random.randint(k_ids, (B, S), 0, VOCAB, dtype=jnp.int32)

    ref = reference_forward(vocab_ids, params)

    # 1) default: f32, folded SELU(emb@W1+b1) table, fused in-kernel gather.
    out = jax.block_until_ready(spelling_model_forward(vocab_ids, params))
    assert out.shape == (B, S, 1), out.shape
    assert jnp.allclose(out, ref, atol=5e-3, rtol=5e-3), "fused f32 mismatch"

    # 2) large-vocab fallback path (token-major tiles, in-kernel transpose).
    out_nf = jax.block_until_ready(
        spelling_model_forward(vocab_ids, params, fuse_gather=False))
    assert jnp.allclose(out_nf, ref, atol=5e-3, rtol=5e-3), "fallback f32 mismatch"

    # 3) bf16 MXU inputs, f32 accumulate / activations (all chip generations).
    out_bf16 = jax.block_until_ready(
        spelling_model_forward(vocab_ids, params, matmul_dtype=jnp.bfloat16))
    assert jnp.allclose(out_bf16, ref, atol=5e-2, rtol=5e-2), "bf16 mismatch"

    # 4) full fold: whole frozen network as a (V,) table (pure-inference path).
    out_full = jax.block_until_ready(
        spelling_model_forward(vocab_ids, params, fold="full"))
    assert jnp.allclose(out_full, ref, atol=5e-3, rtol=5e-3), "full-fold mismatch"

    print("KERNEL_OK")
</pallas_src>

<mosaic_0001>
module attributes {stable_mosaic.version = 11 : i64} {
  func.func @spelling_fused_kernel(%arg0: i32, %arg1: memref<1x128xi32, #tpu.memory_space<vmem>>, %arg2: memref<32x64xf32, #tpu.memory_space<vmem>>, %arg3: memref<32x32xf32, #tpu.memory_space<vmem>>, %arg4: memref<32x1xf32, #tpu.memory_space<vmem>>, %arg5: memref<32x1xf32, #tpu.memory_space<vmem>>, %arg6: memref<1x1xf32, #tpu.memory_space<vmem>>, %arg7: memref<1x128xf32, #tpu.memory_space<vmem>>) attributes {dimension_semantics = [#tpu.dimension_semantics<parallel>], iteration_bounds = array<i64: 1>, scalar_prefetch = 0 : i64, scratch_operands = 0 : i64, tpu.core_type = #tpu.core_type<tc>, window_params = [{transform_indices = @transform_0, window_bounds = array<i64: 1, 128>}, {pipeline_mode = #tpu.pipeline_mode<synchronous>, transform_indices = @transform_1, window_bounds = array<i64: 32, 64>}, {pipeline_mode = #tpu.pipeline_mode<synchronous>, transform_indices = @transform_2, window_bounds = array<i64: 32, 32>}, {pipeline_mode = #tpu.pipeline_mode<synchronous>, transform_indices = @transform_3, window_bounds = array<i64: 32, 1>}, {pipeline_mode = #tpu.pipeline_mode<synchronous>, transform_indices = @transform_4, window_bounds = array<i64: 32, 1>}, {pipeline_mode = #tpu.pipeline_mode<synchronous>, transform_indices = @transform_5, window_bounds = array<i64: 1, 1>}, {transform_indices = @transform_6, window_bounds = array<i64: 1, 128>}]} {
    %c0 = arith.constant 0 : index
    %c0_0 = arith.constant 0 : index
    %0 = vector.load %arg1[%c0, %c0_0] : memref<1x128xi32, #tpu.memory_space<vmem>>, vector<1x128xi32>
    %1 = tpu.iota {dimensions = array<i32: 0>} : vector<64x128xi32>
    %2 = vector.broadcast %0 : vector<1x128xi32> to vector<64x128xi32>
    %3 = arith.cmpi eq, %1, %2 : vector<64x128xi32>
    %4 = arith.extui %3 : vector<64x128xi1> to vector<64x128xi32>
    %5 = arith.sitofp %4 : vector<64x128xi32> to vector<64x128xf32>
    %c0_1 = arith.constant 0 : index
    %c0_2 = arith.constant 0 : index
    %6 = vector.load %arg2[%c0_1, %c0_2] : memref<32x64xf32, #tpu.memory_space<vmem>>, vector<32x64xf32>
    %cst = arith.constant dense<0.000000e+00> : vector<32x128xf32>
    %7 = tpu.matmul %6, %5, %cst {dimension_numbers = #tpu.dot_dimension_numbers<[1], [0], [0], [1], [0, 0, 1, 1], [], []>} : vector<32x64xf32>, vector<64x128xf32>, vector<32x128xf32> -> vector<32x128xf32>
    %c0_3 = arith.constant 0 : index
    %c0_4 = arith.constant 0 : index
    %8 = vector.load %arg3[%c0_3, %c0_4] : memref<32x32xf32, #tpu.memory_space<vmem>>, vector<32x32xf32>
    %cst_5 = arith.constant dense<0.000000e+00> : vector<32x128xf32>
    %9 = tpu.matmul %8, %7, %cst_5 {dimension_numbers = #tpu.dot_dimension_numbers<[1], [0], [0], [1], [0, 0, 1, 1], [], []>} : vector<32x32xf32>, vector<32x128xf32>, vector<32x128xf32> -> vector<32x128xf32>
    %c0_6 = arith.constant 0 : index
    %c0_7 = arith.constant 0 : index
    %10 = vector.load %arg4[%c0_6, %c0_7] : memref<32x1xf32, #tpu.memory_space<vmem>>, vector<32x1xf32>
    %11 = vector.broadcast %10 : vector<32x1xf32> to vector<32x128xf32>
    %12 = arith.addf %9, %11 : vector<32x128xf32>
    %13 = math.tanh %12 : vector<32x128xf32>
    %c0_8 = arith.constant 0 : index
    %c0_9 = arith.constant 0 : index
    %14 = vector.load %arg5[%c0_8, %c0_9] : memref<32x1xf32, #tpu.memory_space<vmem>>, vector<32x1xf32>
    %15 = vector.broadcast %14 : vector<32x1xf32> to vector<32x128xf32>
    %16 = arith.mulf %13, %15 : vector<32x128xf32>
    %cst_10 = arith.constant dense<0.000000e+00> : vector<128xf32>
    %17 = vector.multi_reduction <add>, %16, %cst_10 [0] : vector<32x128xf32> to vector<128xf32>
    %18 = vector.shape_cast %17 : vector<128xf32> to vector<1x128xf32>
    %c0_11 = arith.constant 0 : index
    %c0_12 = arith.constant 0 : index
    %19 = vector.load %arg6[%c0_11, %c0_12] : memref<1x1xf32, #tpu.memory_space<vmem>>, vector<1x1xf32>
    %20 = vector.broadcast %19 : vector<1x1xf32> to vector<1x128xf32>
    %21 = arith.addf %18, %20 : vector<1x128xf32>
    %c0_13 = arith.constant 0 : index
    %c0_14 = arith.constant 0 : index
    %22 = vector.load %arg7[%c0_13, %c0_14] : memref<1x128xf32, #tpu.memory_space<vmem>>, vector<1x128xf32>
    tpu.vector_store %arg7[%c0_13, %c0_14], %21 {strides = array<i32>} : memref<1x128xf32, #tpu.memory_space<vmem>>, vector<1x128xf32>,
    return
  }
  func.func @transform_0(%arg0: i32) -> (i32, i32) {
    %c0_i32 = arith.constant 0 : i32
    %c0_i32_0 = arith.constant 0 : i32
    return %c0_i32, %arg0 : i32, i32
  }
  func.func @transform_1(%arg0: i32) -> (i32, i32) {
    %c0_i32 = arith.constant 0 : i32
    %c0_i32_0 = arith.constant 0 : i32
    %c0_i32_1 = arith.constant 0 : i32
    return %c0_i32, %c0_i32_0 : i32, i32
  }
  func.func @transform_2(%arg0: i32) -> (i32, i32) {
    %c0_i32 = arith.constant 0 : i32
    %c0_i32_0 = arith.constant 0 : i32
    %c0_i32_1 = arith.constant 0 : i32
    return %c0_i32, %c0_i32_0 : i32, i32
  }
  func.func @transform_3(%arg0: i32) -> (i32, i32) {
    %c0_i32 = arith.constant 0 : i32
    %c0_i32_0 = arith.constant 0 : i32
    %c0_i32_1 = arith.constant 0 : i32
    return %c0_i32, %c0_i32_0 : i32, i32
  }
  func.func @transform_4(%arg0: i32) -> (i32, i32) {
    %c0_i32 = arith.constant 0 : i32
    %c0_i32_0 = arith.constant 0 : i32
    %c0_i32_1 = arith.constant 0 : i32
    return %c0_i32, %c0_i32_0 : i32, i32
  }
  func.func @transform_5(%arg0: i32) -> (i32, i32) {
    %c0_i32 = arith.constant 0 : i32
    %c0_i32_0 = arith.constant 0 : i32
    %c0_i32_1 = arith.constant 0 : i32
    return %c0_i32, %c0_i32_0 : i32, i32
  }
  func.func @transform_6(%arg0: i32) -> (i32, i32) {
    %c0_i32 = arith.constant 0 : i32
    %c0_i32_0 = arith.constant 0 : i32
    return %c0_i32, %arg0 : i32, i32
  }
}

</mosaic_0001>

<llo_original>
// kernel: tpu_custom_call.1
$region0: #{tpu_custom_call.1}
  #allocation0 [shape = 'u32[]', space=smem, size = 0x4, offset = 0x4, fixed_abs, tag = 'smem constant byte address 0x4 - core index']
  #allocation1 [shape = 'u32[144,128]{1,0:T(1,128)}', space=vmem, size = 0x12000, scoped, tag = 'internal scratch']
  #allocation2 [shape = 'f32[1,1]{1,0:T(1,128)S(1)}', space=vmem, size = 0x200, scoped, tag = 'scoped memory for tpu_custom_call.1']
  %s0 = inlined_call_operand.vmem [shape: s32[1,128], index: 0, kind: input, shape index: {}]
  %s1 = inlined_call_operand.vmem [shape: f32[32,64], index: 1, kind: input, shape index: {}]
  %s2 = inlined_call_operand.vmem [shape: f32[32,32], index: 2, kind: input, shape index: {}]
  %s3 = inlined_call_operand.vmem [shape: f32[32,1], index: 3, kind: input, shape index: {}]
  %s4 = inlined_call_operand.vmem [shape: f32[32,1], index: 4, kind: input, shape index: {}]
  %s5 = inlined_call_operand.<no memory space> [shape: f32[1,1], index: 5, kind: input, shape index: {}]
  %s6 = inlined_call_operand.hbm [shape: f32[1,128], index: 6, kind: output, shape index: {}]
  %s7 = sld [smem:[#allocation0]]
  $region34: #{tpu_custom_call.1} parent=0
    _
  %s9 = ssub.s32 1, %s7
  %s10 = scalar_select 0, %s9, %s7
  %v11 = vstv %s5
  %12 = vst [vmem:[#allocation2] sm:$0x1] %v11
  $region1: #{tpu_custom_call.1} parent=0
    #allocation3 [shape = 'u8[512]{0}', space=vmem, size = 0x400, scoped, tag = 'output window, operand 0, single buffered']
    #allocation4 [shape = 's32[1]{0}', space=sflag, size = 0x4, scoped, tag = 'scoped memory for tpu_custom_call.1']
    %13 = vsyncpa [#allocation4], 0
    // Predicated region
    $region2: #{tpu_custom_call.1} parent=1 // pred_check
      _
    $region3: #{tpu_custom_call.1} parent=1 // pred_check_branch
      %15 = sbr.rel (0) target = $region5
    $region4: #{tpu_custom_call.1} parent=1 // pred_region
      _
    $region5: #{tpu_custom_call.1} parent=1 // pred_fallthru
      _
    // Predicated region
    $region6: #{tpu_custom_call.1} parent=1 // pred_check
      _
    $region7: #{tpu_custom_call.1} parent=1 // pred_check_branch
      %17 = sbr.rel (0) target = $region9
    $region8: #{tpu_custom_call.1} parent=1 // pred_region
      _
    $region9: #{tpu_custom_call.1} parent=1 // pred_fallthru
      _
    // Predicated region
    $region10: #{tpu_custom_call.1} parent=1 // pred_check
      _
    $region11: #{tpu_custom_call.1} parent=1 // pred_check_branch
      %19 = sbr.rel (0) target = $region13
    $region12: #{tpu_custom_call.1} parent=1 // pred_region
      _
    $region13: #{tpu_custom_call.1} parent=1 // pred_fallthru
      _
    // Predicated region
    $region14: #{tpu_custom_call.1} parent=1 // pred_check
      _
    $region15: #{tpu_custom_call.1} parent=1 // pred_check_branch
      %21 = sbr.rel (0) target = $region17
    $region16: #{tpu_custom_call.1} parent=1 // pred_region
      _
    $region17: #{tpu_custom_call.1} parent=1 // pred_fallthru
      _
    // Predicated region
    $region18: #{tpu_custom_call.1} parent=1 // pred_check
      _
    $region19: #{tpu_custom_call.1} parent=1 // pred_check_branch
      %23 = sbr.rel (0) target = $region21
    $region20: #{tpu_custom_call.1} parent=1 // pred_region
      _
    $region21: #{tpu_custom_call.1} parent=1 // pred_fallthru
      _
    // Predicated region
    $region22: #{tpu_custom_call.1} parent=1 // pred_check
      _
    $region23: #{tpu_custom_call.1} parent=1 // pred_check_branch
      %25 = sbr.rel (0) target = $region25
    $region24: #{tpu_custom_call.1} parent=1 // pred_region
      _
    $region25: #{tpu_custom_call.1} parent=1 // pred_fallthru
      _
    %v26 = vld [vmem:[%s0] sm:$0x1]
    %v27 = vlaneseq
    %v28 = vshrl.u32 %v27, 7
    %v29 = vadd.s32 %v28, 8
    %v30 = vadd.s32 %v28, 16
    %v31 = vadd.s32 %v28, 24
    %v32 = vadd.s32 %v28, 32
    %v33 = vadd.s32 %v28, 40
    %v34 = vadd.s32 %v28, 48
    %v35 = vadd.s32 %v28, 56
    %v36 = vlaneseq
    %v37 = vshrl.u32 %v36, 7
    %v38 = vsub.s32 0, %v37
    %v39 = vrot.slane %v26, %v38
    %vm40 = vcmp.eq.s32.totalorder %v28, %v39
    %vm41 = vcmp.eq.s32.totalorder %v29, %v39
    %vm42 = vcmp.eq.s32.totalorder %v30, %v39
    %vm43 = vcmp.eq.s32.totalorder %v31, %v39
    %vm44 = vcmp.eq.s32.totalorder %v32, %v39
    %vm45 = vcmp.eq.s32.totalorder %v33, %v39
    %vm46 = vcmp.eq.s32.totalorder %v34, %v39
    %vm47 = vcmp.eq.s32.totalorder %v35, %v39
    %v48 = vsel %vm40, 1, 0
    %v49 = vsel %vm41, 1, 0
    %v50 = vsel %vm42, 1, 0
    %v51 = vsel %vm43, 1, 0
    %v52 = vsel %vm44, 1, 0
    %v53 = vsel %vm45, 1, 0
    %v54 = vsel %vm46, 1, 0
    %v55 = vsel %vm47, 1, 0
    %v56 = vcvt.s32.f32 %v48
    %v57 = vcvt.s32.f32 %v49
    %v58 = vcvt.s32.f32 %v50
    %v59 = vcvt.s32.f32 %v51
    %v60 = vcvt.s32.f32 %v52
    %v61 = vcvt.s32.f32 %v53
    %v62 = vcvt.s32.f32 %v54
    %v63 = vcvt.s32.f32 %v55
    %v64 = vld [vmem:[%s1] sm:$0xff]
    %v65 = vld [vmem:[%s1 + $0x8] sm:$0xff]
    %v66 = vld [vmem:[%s1 + $0x10] sm:$0xff]
    %v67 = vld [vmem:[%s1 + $0x18] sm:$0xff]
    %vm68 = vcmask 523264
    %v70 = vsel %vm68, %v64, 0
    %v73 = vsel %vm68, %v65, 0
    %v76 = vsel %vm68, %v66, 0
    %v79 = vsel %vm68, %v67, 0
    %81 = vmatprep.subr.mxu0 0.0
    %82 = vmatpush1.msra.mxu0 %v56
    %83 = vmatprep.subr.mxu0 0.0
    %84 = vmatpush1.msra.mxu0 %v57
    %85 = vmatprep.subr.mxu0 0.0
    %86 = vmatpush1.msra.mxu0 %v58
    %87 = vmatprep.subr.mxu0 0.0
    %88 = vmatpush1.msra.mxu0 %v59
    %89 = vmatprep.subr.mxu0 0.0
    %90 = vmatpush1.msra.mxu0 %v60
    %91 = vmatprep.subr.mxu0 0.0
    %92 = vmatpush1.msra.mxu0 %v61
    %93 = vmatprep.subr.mxu0 0.0
    %94 = vmatpush1.msra.mxu0 %v62
    %95 = vmatprep.subr.mxu0 0.0
    %96 = vmatpush1.msra.mxu0 %v63
    %97 = vmatprep.subr.mxu0 0.0
    %98 = vmatpush1.msra.mxu0 0.0
    %99 = vmatprep.subr.mxu0 0.0
    %100 = vmatpush1.msra.mxu0 0.0
    %101 = vmatprep.subr.mxu0 0.0
    %102 = vmatpush1.msra.mxu0 0.0
    %103 = vmatprep.subr.mxu0 0.0
    %104 = vmatpush1.msra.mxu0 0.0
    %105 = vmatprep.subr.mxu0 0.0
    %106 = vmatpush1.msra.mxu0 0.0
    %107 = vmatprep.subr.mxu0 0.0
    %108 = vmatpush1.msra.mxu0 0.0
    %109 = vmatprep.subr.mxu0 0.0
    %110 = vmatpush1.msra.mxu0 0.0
    %111 = vmatprep.subr.mxu0 0.0
    %112 = vmatpush1.msra.mxu0 0.0
    %113 = vmatprep.subr.mxu0 0.0
    %114 = vmatpush1.msra.mxu0 0.0
    %115 = vmatprep.subr.mxu0 0.0
    %116 = vmatpush1.msra.mxu0 0.0
    %117 = vmatprep.subr.mxu0 0.0
    %118 = vmatpush1.msra.mxu0 0.0
    %119 = vmatprep.subr.mxu0 0.0
    %120 = vmatpush1.msra.mxu0 0.0
    %121 = vmatprep.subr.mxu0 0.0
    %122 = vmatpush1.msra.mxu0 0.0
    %123 = vmatprep.subr.mxu0 0.0
    %124 = vmatpush1.msra.mxu0 0.0
    %125 = vmatprep.subr.mxu0 0.0
    %126 = vmatpush1.msra.mxu0 0.0
    %127 = vmatprep.subr.mxu0 0.0
    %128 = vmatpush1.msra.mxu0 0.0
    %129 = vmatprep.subr.mxu0 0.0
    %130 = vmatpush1.msra.mxu0 0.0
    %131 = vmatprep.subr.mxu0 0.0
    %132 = vmatpush1.msra.mxu0 0.0
    %133 = vmatprep.subr.mxu0 0.0
    %134 = vmatpush1.msra.mxu0 0.0
    %135 = vmatprep.subr.mxu0 0.0
    %136 = vmatpush1.msra.mxu0 0.0
    %137 = vmatprep.subr.mxu0 0.0
    %138 = vmatpush1.msra.mxu0 0.0
    %139 = vmatprep.subr.mxu0 0.0
    %140 = vmatpush1.msra.mxu0 0.0
    %141 = vmatprep.subr.mxu0 0.0
    %142 = vmatpush1.msra.mxu0 0.0
    %143 = vmatprep.subr.mxu0 0.0
    %144 = vmatpush1.msra.mxu0 0.0
    %145 = vmatprep.mubr.f32.mxu0 0.0
    %146 = vmatmul.mubr.f32.gmra.mrb[0].mxu0 %v70
    %v147 = vpop.f32.mrb[0].mxu0
    %v148 = vadd.f32 0.0, %v147
    %v149 = vpop.f32.mrb[0].mxu0
    %150 = vmatprep.mubr.f32.mxu0 0.0
    %151 = vmatmul.mubr.f32.gmra.mrb[0].mxu0 %v73
    %v152 = vpop.f32.mrb[0].mxu0
    %v153 = vadd.f32 0.0, %v152
    %v154 = vpop.f32.mrb[0].mxu0
    %155 = vmatprep.mubr.f32.mxu0 0.0
    %156 = vmatmul.mubr.f32.gmra.mrb[0].mxu0 %v76
    %v157 = vpop.f32.mrb[0].mxu0
    %v158 = vadd.f32 0.0, %v157
    %v159 = vpop.f32.mrb[0].mxu0
    %160 = vmatprep.mubr.f32.mxu0 0.0
    %161 = vmatmul.mubr.f32.gmra.mrb[0].mxu0 %v79
    %v162 = vpop.f32.mrb[0].mxu0
    %v163 = vadd.f32 0.0, %v162
    %v164 = vpop.f32.mrb[0].mxu0
    %165 = vdwg.mxu0
    %v166 = vld [vmem:[%s2] sm:$0xff]
    %v167 = vld [vmem:[%s2 + $0x8] sm:$0xff]
    %v168 = vld [vmem:[%s2 + $0x10] sm:$0xff]
    %v169 = vld [vmem:[%s2 + $0x18] sm:$0xff]
    %v170 = vld [vmem:[%s3] sm:$0xff]
    %v171 = vld [vmem:[%s3 + $0x8] sm:$0xff]
    %v172 = vld [vmem:[%s3 + $0x10] sm:$0xff]
    %v173 = vld [vmem:[%s3 + $0x18] sm:$0xff]
    %175 = vset.pattern.permute.xlu0 0
    %176 = vperm.xlu0 %175, %v170
    %v177 = vpop.permute.xlu0 %176
    %180 = vset.pattern.permute.xlu0 0
    %181 = vperm.xlu0 %180, %v171
    %v182 = vpop.permute.xlu0 %181
    %185 = vset.pattern.permute.xlu0 0
    %186 = vperm.xlu0 %185, %v172
    %v187 = vpop.permute.xlu0 %186
    %190 = vset.pattern.permute.xlu0 0
    %191 = vperm.xlu0 %190, %v173
    %v192 = vpop.permute.xlu0 %191
    %vm194 = vcmask 261120
    %v196 = vsel %vm194, %v166, 0
    %v199 = vsel %vm194, %v167, 0
    %v202 = vsel %vm194, %v168, 0
    %v205 = vsel %vm194, %v169, 0
    %207 = vmatprep.subr.mxu0 0.0
    %208 = vmatpush1.msra.mxu0 %v148
    %209 = vmatprep.subr.mxu0 0.0
    %210 = vmatpush1.msra.mxu0 %v153
    %211 = vmatprep.subr.mxu0 0.0
    %212 = vmatpush1.msra.mxu0 %v158
    %213 = vmatprep.subr.mxu0 0.0
    %214 = vmatpush1.msra.mxu0 %v163
    %215 = vmatprep.subr.mxu0 0.0
    %216 = vmatpush1.msra.mxu0 0.0
    %217 = vmatprep.subr.mxu0 0.0
    %218 = vmatpush1.msra.mxu0 0.0
    %219 = vmatprep.subr.mxu0 0.0
    %220 = vmatpush1.msra.mxu0 0.0
    %221 = vmatprep.subr.mxu0 0.0
    %222 = vmatpush1.msra.mxu0 0.0
    %223 = vmatprep.subr.mxu0 0.0
    %224 = vmatpush1.msra.mxu0 0.0
    %225 = vmatprep.subr.mxu0 0.0
    %226 = vmatpush1.msra.mxu0 0.0
    %227 = vmatprep.subr.mxu0 0.0
    %228 = vmatpush1.msra.mxu0 0.0
    %229 = vmatprep.subr.mxu0 0.0
    %230 = vmatpush1.msra.mxu0 0.0
    %231 = vmatprep.subr.mxu0 0.0
    %232 = vmatpush1.msra.mxu0 0.0
    %233 = vmatprep.subr.mxu0 0.0
    %234 = vmatpush1.msra.mxu0 0.0
    %235 = vmatprep.subr.mxu0 0.0
    %236 = vmatpush1.msra.mxu0 0.0
    %237 = vmatprep.subr.mxu0 0.0
    %238 = vmatpush1.msra.mxu0 0.0
    %239 = vmatprep.subr.mxu0 0.0
    %240 = vmatpush1.msra.mxu0 0.0
    %241 = vmatprep.subr.mxu0 0.0
    %242 = vmatpush1.msra.mxu0 0.0
    %243 = vmatprep.subr.mxu0 0.0
    %244 = vmatpush1.msra.mxu0 0.0
    %245 = vmatprep.subr.mxu0 0.0
    %246 = vmatpush1.msra.mxu0 0.0
    %247 = vmatprep.subr.mxu0 0.0
    %248 = vmatpush1.msra.mxu0 0.0
    %249 = vmatprep.subr.mxu0 0.0
    %250 = vmatpush1.msra.mxu0 0.0
    %251 = vmatprep.subr.mxu0 0.0
    %252 = vmatpush1.msra.mxu0 0.0
    %253 = vmatprep.subr.mxu0 0.0
    %254 = vmatpush1.msra.mxu0 0.0
    %255 = vmatprep.subr.mxu0 0.0
    %256 = vmatpush1.msra.mxu0 0.0
    %257 = vmatprep.subr.mxu0 0.0
    %258 = vmatpush1.msra.mxu0 0.0
    %259 = vmatprep.subr.mxu0 0.0
    %260 = vmatpush1.msra.mxu0 0.0
    %261 = vmatprep.subr.mxu0 0.0
    %262 = vmatpush1.msra.mxu0 0.0
    %263 = vmatprep.subr.mxu0 0.0
    %264 = vmatpush1.msra.mxu0 0.0
    %265 = vmatprep.subr.mxu0 0.0
    %266 = vmatpush1.msra.mxu0 0.0
    %267 = vmatprep.subr.mxu0 0.0
    %268 = vmatpush1.msra.mxu0 0.0
    %269 = vmatprep.subr.mxu0 0.0
    %270 = vmatpush1.msra.mxu0 0.0
    %271 = vmatprep.mubr.f32.mxu0 0.0
    %272 = vmatmul.mubr.f32.gmra.mrb[0].mxu0 %v196
    %v273 = vpop.f32.mrb[0].mxu0
    %v274 = vadd.f32 %v177, %v273
    %v275 = vpop.f32.mrb[0].mxu0
    %276 = vmatprep.mubr.f32.mxu0 0.0
    %277 = vmatmul.mubr.f32.gmra.mrb[0].mxu0 %v199
    %v278 = vpop.f32.mrb[0].mxu0
    %v279 = vadd.f32 %v182, %v278
    %v280 = vpop.f32.mrb[0].mxu0
    %281 = vmatprep.mubr.f32.mxu0 0.0
    %282 = vmatmul.mubr.f32.gmra.mrb[0].mxu0 %v202
    %v283 = vpop.f32.mrb[0].mxu0
    %v284 = vadd.f32 %v187, %v283
    %v285 = vpop.f32.mrb[0].mxu0
    %286 = vmatprep.mubr.f32.mxu0 0.0
    %287 = vmatmul.mubr.f32.gmra.mrb[0].mxu0 %v205
    %v288 = vpop.f32.mrb[0].mxu0
    %v289 = vadd.f32 %v192, %v288
    %v290 = vpop.f32.mrb[0].mxu0
    %291 = vdwg.mxu0
    %v292 = vtanh.pop %v274
    %v293 = vtanh.pop %v279
    %v294 = vtanh.pop %v284
    %v295 = vtanh.pop %v289
    %v296 = vld [vmem:[%s4] sm:$0xff]
    %v297 = vld [vmem:[%s4 + $0x8] sm:$0xff]
    %v298 = vld [vmem:[%s4 + $0x10] sm:$0xff]
    %v299 = vld [vmem:[%s4 + $0x18] sm:$0xff]
    %301 = vset.pattern.permute.xlu0 0
    %302 = vperm.xlu0 %301, %v296
    %v303 = vpop.permute.xlu0 %302
    %306 = vset.pattern.permute.xlu0 0
    %307 = vperm.xlu0 %306, %v297
    %v308 = vpop.permute.xlu0 %307
    %311 = vset.pattern.permute.xlu0 0
    %312 = vperm.xlu0 %311, %v298
    %v313 = vpop.permute.xlu0 %312
    %316 = vset.pattern.permute.xlu0 0
    %317 = vperm.xlu0 %316, %v299
    %v318 = vpop.permute.xlu0 %317
    %v320 = vmul.f32 %v292, %v303
    %v321 = vmul.f32 %v293, %v308
    %v322 = vmul.f32 %v294, %v313
    %v323 = vmul.f32 %v295, %v318
    %v324 = vadd.f32 %v320, %v321
    %v325 = vadd.f32 %v324, %v322
    %v326 = vadd.f32 %v325, %v323
    %v327 = vrot.slane %v326, 4
    %v328 = vadd.f32 %v326, %v327
    %v329 = vrot.slane %v328, 2
    %v330 = vadd.f32 %v328, %v329
    %v331 = vrot.slane %v330, 1
    %v332 = vadd.f32 %v330, %v331
    %v333 = vld [vmem:[#allocation2] sm:$0x1]
    %335 = vset.pattern.permute.xlu0 0
    %336 = vperm.xlu0 %335, %v333
    %v337 = vpop.permute.xlu0 %336
    %v339 = vlaneseq
    %v340 = vshrl.u32 %v339, 7
    %v341 = vsub.s32 0, %v340
    %v342 = vrot.slane %v337, %v341
    %v343 = vadd.f32 %v332, %v342
    %344 = vst [vmem:[#allocation3] sm:$0x1] %v343
    // Predicated region
    $region26: #{tpu_custom_call.1} parent=1 // pred_check
      _
    $region27: #{tpu_custom_call.1} parent=1 // pred_check_branch
      %346 = sbr.rel (0) target = $region29
    $region28: #{tpu_custom_call.1} parent=1 // pred_region
      %s348 = ssub.s32 16, 16
      %349 = vsyncadd [#allocation4], %s348
      %s351 = sshll.u32 [#allocation3], 4
      %s352 = int_to_ptr.vmem [resolvable:$true] %s351
      %354 = dma.vmem_to_hbm [thread:$0]  %s352, 16, %s6, [#allocation4]
    $region29: #{tpu_custom_call.1} parent=1 // pred_fallthru
      _
    // Predicated region
    $region30: #{tpu_custom_call.1} parent=1 // pred_check
      _
    $region31: #{tpu_custom_call.1} parent=1 // pred_check_branch
      %356 = sbr.rel (0) target = $region33
    $region32: #{tpu_custom_call.1} parent=1 // pred_region
      %357 = dma.done [#allocation4], 16
    $region33: #{tpu_custom_call.1} parent=1 // pred_fallthru
      _
    %358 = vsyncpa [#allocation4], 1

</llo_original>
